<compile_context>
chip_gen: v6e
topology: v6e:2x2x1
jax: 0.10.0
libtpu: 0.0.40
codegen_flags: <defaults>
</compile_context>

<pallas_src>
import functools

import jax
import jax.numpy as jnp
from jax.experimental import pallas as pl
from jax.experimental.pallas import tpu as pltpu


def lstm_kernel(x_ref, wih_ref, whh_ref, b_ref, lw_ref, lb_ref, out_ref, xp_ref,
                *, seq_len, batch):
    """Whole LSTM forward in one invocation.

    x_ref:   (B*T, D)  batch-major flattened input (row index = b*T + t)
    wih_ref: (D, 4H)   W_ih^T
    whh_ref: (H, 4H)   W_hh^T
    b_ref:   (1, 4H)   b_ih + b_hh
    lw_ref:  (1, H)    final Linear weight (row)
    lb_ref:  (1, 1)    final Linear bias
    out_ref: (B, 1)
    xp_ref:  (B*T, 4H) VMEM scratch for the hoisted input projection
    """
    B = batch
    T = seq_len
    H = whh_ref.shape[0]

    # ---- Prologue: hoisted input projection for ALL timesteps, one MXU pass. ----
    # Rows stay in b*T + t order, so no host-side transpose is needed.
    xp_ref[...] = (
        jnp.dot(x_ref[...], wih_ref[...], preferred_element_type=jnp.float32)
        + b_ref[...]
    )

    # Hoisted recurrent-weight load: lives in vregs for the whole unrolled loop.
    whh = whh_ref[...]

    # Lane mask selecting the "g" gate block (lanes [2H, 3H)) of the fused gate tile.
    lane = jax.lax.broadcasted_iota(jnp.int32, (B, 4 * H), 1)
    g_mask = (lane >= 2 * H) & (lane < 3 * H)

    def step(t, carry):
        h, c = carry                                      # (B, H) each, live in vregs
        # Timestep t rows of the projection (b*T + t) via a strided sublane read.
        x_t = xp_ref[pl.ds(t, B, stride=T), :]            # (B, 4H)
        gates = x_t + jnp.dot(h, whh, preferred_element_type=jnp.float32)

        # Single EUP pass: tanh on the g lanes; sigmoid(x) = 0.5*(1 + tanh(0.5*x)) elsewhere.
        pre = jnp.where(g_mask, gates, 0.5 * gates)
        th = jnp.tanh(pre)
        act = jnp.where(g_mask, th, 0.5 * th + 0.5)

        i_g = act[:, 0 * H:1 * H]
        f_g = act[:, 1 * H:2 * H]
        g_g = act[:, 2 * H:3 * H]
        o_g = act[:, 3 * H:4 * H]

        c_new = f_g * c + i_g * g_g
        h_new = o_g * jnp.tanh(c_new)
        return h_new, c_new

    h0 = jnp.zeros((B, H), jnp.float32)
    c0 = jnp.zeros((B, H), jnp.float32)
    h_fin, _ = jax.lax.fori_loop(0, T, step, (h0, c0), unroll=True)

    # ---- Linear(H -> 1): VPU multiply + lane reduction (no N=1 MXU matmul). ----
    out_ref[...] = (
        jnp.sum(h_fin * lw_ref[...], axis=-1, keepdims=True) + lb_ref[...]
    ).astype(out_ref.dtype)


def lstm_forward(x, params):
    """x: (B, T, D) float32.  Returns (B,) float32 (matches `.flatten()` in torch)."""
    B, T, D = x.shape
    H = params["whh_t"].shape[0]
    # Free row-major reshape (no transpose); row index = b*T + t.
    x2d = x.reshape(B * T, D)

    # Advisory cost hint so XLA schedules this tiny call tightly.
    flops = 2 * T * B * (D + H) * 4 * H + 10 * T * B * H
    transcendentals = T * B * (4 * H + H)          # one fused tanh pass + tanh(c) per step
    bytes_accessed = 4 * (x2d.size + params["wih_t"].size + params["whh_t"].size
                          + params["b"].size + params["lw_row"].size
                          + params["lb"].size + B)

    vmem = pl.BlockSpec(memory_space=pltpu.MemorySpace.VMEM)   # whole array resident in VMEM
    out = pl.pallas_call(
        functools.partial(lstm_kernel, seq_len=T, batch=B),
        out_shape=jax.ShapeDtypeStruct((B, 1), jnp.float32),
        in_specs=[vmem] * 6,
        out_specs=vmem,
        scratch_shapes=[pltpu.VMEM((B * T, 4 * H), jnp.float32)],  # hoisted x-projection
        cost_estimate=pl.CostEstimate(flops=flops,
                                      transcendentals=transcendentals,
                                      bytes_accessed=bytes_accessed),
    )(x2d, params["wih_t"], params["whh_t"], params["b"],
      params["lw_row"], params["lb"])
    return out.reshape(-1)


def lstm_reference(x, params):
    """Pure-JAX reference of the same forward pass (sanity check)."""
    wih_t, whh_t, b = params["wih_t"], params["whh_t"], params["b"]
    lw_row, lb = params["lw_row"], params["lb"]
    B = x.shape[0]
    H = whh_t.shape[0]
    h0 = jnp.zeros((B, H), jnp.float32)
    c0 = jnp.zeros((B, H), jnp.float32)

    def step(carry, x_t):
        h, c = carry
        gates = x_t @ wih_t + h @ whh_t + b
        i = jax.nn.sigmoid(gates[:, 0 * H:1 * H])
        f = jax.nn.sigmoid(gates[:, 1 * H:2 * H])
        g = jnp.tanh(gates[:, 2 * H:3 * H])
        o = jax.nn.sigmoid(gates[:, 3 * H:4 * H])
        c = f * c + i * g
        h = o * jnp.tanh(c)
        return (h, c), None

    (h, _), _ = jax.lax.scan(step, (h0, c0), jnp.transpose(x, (1, 0, 2)))
    return (h @ lw_row.T + lb).reshape(-1)


def init_params(key, num_sensors, hidden_units):
    """Deterministic parameter init mimicking PyTorch's U(-1/sqrt(H), 1/sqrt(H))."""
    H, D = hidden_units, num_sensors
    k = 1.0 / jnp.sqrt(jnp.float32(H))
    keys = jax.random.split(key, 6)
    w_ih = jax.random.uniform(keys[0], (4 * H, D), jnp.float32, -k, k)
    w_hh = jax.random.uniform(keys[1], (4 * H, H), jnp.float32, -k, k)
    b_ih = jax.random.uniform(keys[2], (4 * H,), jnp.float32, -k, k)
    b_hh = jax.random.uniform(keys[3], (4 * H,), jnp.float32, -k, k)
    lin_w = jax.random.uniform(keys[4], (1, H), jnp.float32, -k, k)
    lin_b = jax.random.uniform(keys[5], (1,), jnp.float32, -k, k)
    return {
        "wih_t": w_ih.T,                          # (D, 4H)
        "whh_t": w_hh.T,                          # (H, 4H)
        "b": (b_ih + b_hh).reshape(1, 4 * H),     # (1, 4H)
        "lw_row": lin_w,                          # (1, H)
        "lb": lin_b.reshape(1, 1),                # (1, 1)
    }


if __name__ == "__main__":
    num_sensors = 4     # input feature count
    hidden_units = 32   # LSTM hidden size
    batch = 8
    seq = 8

    key = jax.random.PRNGKey(0)
    k_x, k_p = jax.random.split(key)
    x = jax.random.normal(k_x, (batch, seq, num_sensors), jnp.float32)
    params = init_params(k_p, num_sensors, hidden_units)

    out = jax.block_until_ready(lstm_forward(x, params))
    ref = jax.block_until_ready(lstm_reference(x, params))

    assert out.shape == (batch,), out.shape
    assert jnp.allclose(out, ref, atol=1e-3, rtol=1e-3), (out, ref)
    print("KERNEL_OK")
</pallas_src>

<mosaic_0001>
module attributes {stable_mosaic.version = 11 : i64} {
  func.func @lstm_kernel(%arg0: memref<64x4xf32, #tpu.memory_space<vmem>>, %arg1: memref<4x128xf32, #tpu.memory_space<vmem>>, %arg2: memref<32x128xf32, #tpu.memory_space<vmem>>, %arg3: memref<1x128xf32, #tpu.memory_space<vmem>>, %arg4: memref<1x32xf32, #tpu.memory_space<vmem>>, %arg5: memref<1x1xf32, #tpu.memory_space<vmem>>, %arg6: memref<8x1xf32, #tpu.memory_space<vmem>>, %arg7: memref<64x128xf32, #tpu.memory_space<vmem>>) attributes {dimension_semantics = [], scalar_prefetch = 0 : i64, scratch_operands = 1 : i64, tpu.core_type = #tpu.core_type<tc>} {
    %c0 = arith.constant 0 : index
    %c0_0 = arith.constant 0 : index
    %0 = vector.load %arg0[%c0, %c0_0] : memref<64x4xf32, #tpu.memory_space<vmem>>, vector<64x4xf32>
    %c0_1 = arith.constant 0 : index
    %c0_2 = arith.constant 0 : index
    %1 = vector.load %arg1[%c0_1, %c0_2] : memref<4x128xf32, #tpu.memory_space<vmem>>, vector<4x128xf32>
    %cst = arith.constant dense<0.000000e+00> : vector<64x128xf32>
    %2 = tpu.matmul %0, %1, %cst {dimension_numbers = #tpu.dot_dimension_numbers<[1], [0], [0], [1], [0, 0, 1, 1], [], []>} : vector<64x4xf32>, vector<4x128xf32>, vector<64x128xf32> -> vector<64x128xf32>
    %c0_3 = arith.constant 0 : index
    %c0_4 = arith.constant 0 : index
    %3 = vector.load %arg3[%c0_3, %c0_4] : memref<1x128xf32, #tpu.memory_space<vmem>>, vector<1x128xf32>
    %4 = vector.broadcast %3 : vector<1x128xf32> to vector<64x128xf32>
    %5 = arith.addf %2, %4 : vector<64x128xf32>
    %c0_5 = arith.constant 0 : index
    %c0_6 = arith.constant 0 : index
    %6 = vector.load %arg7[%c0_5, %c0_6] : memref<64x128xf32, #tpu.memory_space<vmem>>, vector<64x128xf32>
    tpu.vector_store %arg7[%c0_5, %c0_6], %5 {strides = array<i32>} : memref<64x128xf32, #tpu.memory_space<vmem>>, vector<64x128xf32>,
    %c0_7 = arith.constant 0 : index
    %c0_8 = arith.constant 0 : index
    %7 = vector.load %arg2[%c0_7, %c0_8] : memref<32x128xf32, #tpu.memory_space<vmem>>, vector<32x128xf32>
    %8 = tpu.iota {dimensions = array<i32: 1>} : vector<8x128xi32>
    %c64_i32 = arith.constant 64 : i32
    %9 = vector.broadcast %c64_i32 : i32 to vector<8x128xi32>
    %10 = arith.cmpi sge, %8, %9 : vector<8x128xi32>
    %c96_i32 = arith.constant 96 : i32
    %11 = vector.broadcast %c96_i32 : i32 to vector<8x128xi32>
    %12 = arith.cmpi slt, %8, %11 : vector<8x128xi32>
    %13 = arith.andi %10, %12 : vector<8x128xi1>
    %cst_9 = arith.constant 0.000000e+00 : f32
    %14 = vector.broadcast %cst_9 : f32 to vector<8x32xf32>
    %cst_10 = arith.constant 0.000000e+00 : f32
    %15 = vector.broadcast %cst_10 : f32 to vector<8x32xf32>
    %c0_i32 = arith.constant 0 : i32
    %16 = arith.index_cast %c0_i32 : i32 to index
    %c0_11 = arith.constant 0 : index
    %17 = tpu.strided_load %arg7[%16, %c0_11] {strides = array<i32: 8, 1>} : memref<64x128xf32, #tpu.memory_space<vmem>>, vector<8x128xf32>
    %cst_12 = arith.constant dense<0.000000e+00> : vector<8x128xf32>
    %18 = tpu.matmul %14, %7, %cst_12 {dimension_numbers = #tpu.dot_dimension_numbers<[1], [0], [0], [1], [0, 0, 1, 1], [], []>} : vector<8x32xf32>, vector<32x128xf32>, vector<8x128xf32> -> vector<8x128xf32>
    %19 = arith.addf %17, %18 : vector<8x128xf32>
    %cst_13 = arith.constant 5.000000e-01 : f32
    %20 = vector.broadcast %cst_13 : f32 to vector<8x128xf32>
    %21 = arith.mulf %20, %19 : vector<8x128xf32>
    %22 = arith.select %13, %19, %21 : vector<8x128xi1>, vector<8x128xf32>
    %23 = math.tanh %22 : vector<8x128xf32>
    %cst_14 = arith.constant 5.000000e-01 : f32
    %24 = vector.broadcast %cst_14 : f32 to vector<8x128xf32>
    %25 = arith.mulf %24, %23 : vector<8x128xf32>
    %cst_15 = arith.constant 5.000000e-01 : f32
    %26 = vector.broadcast %cst_15 : f32 to vector<8x128xf32>
    %27 = arith.addf %25, %26 : vector<8x128xf32>
    %28 = arith.select %13, %23, %27 : vector<8x128xi1>, vector<8x128xf32>
    %29 = vector.extract_strided_slice %28 {offsets = [0, 0], sizes = [8, 32], strides = [1, 1]} : vector<8x128xf32> to vector<8x32xf32>
    %30 = vector.extract_strided_slice %28 {offsets = [0, 32], sizes = [8, 32], strides = [1, 1]} : vector<8x128xf32> to vector<8x32xf32>
    %31 = vector.extract_strided_slice %28 {offsets = [0, 64], sizes = [8, 32], strides = [1, 1]} : vector<8x128xf32> to vector<8x32xf32>
    %32 = vector.extract_strided_slice %28 {offsets = [0, 96], sizes = [8, 32], strides = [1, 1]} : vector<8x128xf32> to vector<8x32xf32>
    %33 = arith.mulf %30, %15 : vector<8x32xf32>
    %34 = arith.mulf %29, %31 : vector<8x32xf32>
    %35 = arith.addf %33, %34 : vector<8x32xf32>
    %36 = math.tanh %35 : vector<8x32xf32>
    %37 = arith.mulf %32, %36 : vector<8x32xf32>
    %c1_i32 = arith.constant 1 : i32
    %38 = arith.index_cast %c1_i32 : i32 to index
    %c0_16 = arith.constant 0 : index
    %39 = tpu.strided_load %arg7[%38, %c0_16] {strides = array<i32: 8, 1>} : memref<64x128xf32, #tpu.memory_space<vmem>>, vector<8x128xf32>
    %cst_17 = arith.constant dense<0.000000e+00> : vector<8x128xf32>
    %40 = tpu.matmul %37, %7, %cst_17 {dimension_numbers = #tpu.dot_dimension_numbers<[1], [0], [0], [1], [0, 0, 1, 1], [], []>} : vector<8x32xf32>, vector<32x128xf32>, vector<8x128xf32> -> vector<8x128xf32>
    %41 = arith.addf %39, %40 : vector<8x128xf32>
    %cst_18 = arith.constant 5.000000e-01 : f32
    %42 = vector.broadcast %cst_18 : f32 to vector<8x128xf32>
    %43 = arith.mulf %42, %41 : vector<8x128xf32>
    %44 = arith.select %13, %41, %43 : vector<8x128xi1>, vector<8x128xf32>
    %45 = math.tanh %44 : vector<8x128xf32>
    %cst_19 = arith.constant 5.000000e-01 : f32
    %46 = vector.broadcast %cst_19 : f32 to vector<8x128xf32>
    %47 = arith.mulf %46, %45 : vector<8x128xf32>
    %cst_20 = arith.constant 5.000000e-01 : f32
    %48 = vector.broadcast %cst_20 : f32 to vector<8x128xf32>
    %49 = arith.addf %47, %48 : vector<8x128xf32>
    %50 = arith.select %13, %45, %49 : vector<8x128xi1>, vector<8x128xf32>
    %51 = vector.extract_strided_slice %50 {offsets = [0, 0], sizes = [8, 32], strides = [1, 1]} : vector<8x128xf32> to vector<8x32xf32>
    %52 = vector.extract_strided_slice %50 {offsets = [0, 32], sizes = [8, 32], strides = [1, 1]} : vector<8x128xf32> to vector<8x32xf32>
    %53 = vector.extract_strided_slice %50 {offsets = [0, 64], sizes = [8, 32], strides = [1, 1]} : vector<8x128xf32> to vector<8x32xf32>
    %54 = vector.extract_strided_slice %50 {offsets = [0, 96], sizes = [8, 32], strides = [1, 1]} : vector<8x128xf32> to vector<8x32xf32>
    %55 = arith.mulf %52, %35 : vector<8x32xf32>
    %56 = arith.mulf %51, %53 : vector<8x32xf32>
    %57 = arith.addf %55, %56 : vector<8x32xf32>
    %58 = math.tanh %57 : vector<8x32xf32>
    %59 = arith.mulf %54, %58 : vector<8x32xf32>
    %c2_i32 = arith.constant 2 : i32
    %60 = arith.index_cast %c2_i32 : i32 to index
    %c0_21 = arith.constant 0 : index
    %61 = tpu.strided_load %arg7[%60, %c0_21] {strides = array<i32: 8, 1>} : memref<64x128xf32, #tpu.memory_space<vmem>>, vector<8x128xf32>
    %cst_22 = arith.constant dense<0.000000e+00> : vector<8x128xf32>
    %62 = tpu.matmul %59, %7, %cst_22 {dimension_numbers = #tpu.dot_dimension_numbers<[1], [0], [0], [1], [0, 0, 1, 1], [], []>} : vector<8x32xf32>, vector<32x128xf32>, vector<8x128xf32> -> vector<8x128xf32>
    %63 = arith.addf %61, %62 : vector<8x128xf32>
    %cst_23 = arith.constant 5.000000e-01 : f32
    %64 = vector.broadcast %cst_23 : f32 to vector<8x128xf32>
    %65 = arith.mulf %64, %63 : vector<8x128xf32>
    %66 = arith.select %13, %63, %65 : vector<8x128xi1>, vector<8x128xf32>
    %67 = math.tanh %66 : vector<8x128xf32>
    %cst_24 = arith.constant 5.000000e-01 : f32
    %68 = vector.broadcast %cst_24 : f32 to vector<8x128xf32>
    %69 = arith.mulf %68, %67 : vector<8x128xf32>
    %cst_25 = arith.constant 5.000000e-01 : f32
    %70 = vector.broadcast %cst_25 : f32 to vector<8x128xf32>
    %71 = arith.addf %69, %70 : vector<8x128xf32>
    %72 = arith.select %13, %67, %71 : vector<8x128xi1>, vector<8x128xf32>
    %73 = vector.extract_strided_slice %72 {offsets = [0, 0], sizes = [8, 32], strides = [1, 1]} : vector<8x128xf32> to vector<8x32xf32>
    %74 = vector.extract_strided_slice %72 {offsets = [0, 32], sizes = [8, 32], strides = [1, 1]} : vector<8x128xf32> to vector<8x32xf32>
    %75 = vector.extract_strided_slice %72 {offsets = [0, 64], sizes = [8, 32], strides = [1, 1]} : vector<8x128xf32> to vector<8x32xf32>
    %76 = vector.extract_strided_slice %72 {offsets = [0, 96], sizes = [8, 32], strides = [1, 1]} : vector<8x128xf32> to vector<8x32xf32>
    %77 = arith.mulf %74, %57 : vector<8x32xf32>
    %78 = arith.mulf %73, %75 : vector<8x32xf32>
    %79 = arith.addf %77, %78 : vector<8x32xf32>
    %80 = math.tanh %79 : vector<8x32xf32>
    %81 = arith.mulf %76, %80 : vector<8x32xf32>
    %c3_i32 = arith.constant 3 : i32
    %82 = arith.index_cast %c3_i32 : i32 to index
    %c0_26 = arith.constant 0 : index
    %83 = tpu.strided_load %arg7[%82, %c0_26] {strides = array<i32: 8, 1>} : memref<64x128xf32, #tpu.memory_space<vmem>>, vector<8x128xf32>
    %cst_27 = arith.constant dense<0.000000e+00> : vector<8x128xf32>
    %84 = tpu.matmul %81, %7, %cst_27 {dimension_numbers = #tpu.dot_dimension_numbers<[1], [0], [0], [1], [0, 0, 1, 1], [], []>} : vector<8x32xf32>, vector<32x128xf32>, vector<8x128xf32> -> vector<8x128xf32>
    %85 = arith.addf %83, %84 : vector<8x128xf32>
    %cst_28 = arith.constant 5.000000e-01 : f32
    %86 = vector.broadcast %cst_28 : f32 to vector<8x128xf32>
    %87 = arith.mulf %86, %85 : vector<8x128xf32>
    %88 = arith.select %13, %85, %87 : vector<8x128xi1>, vector<8x128xf32>
    %89 = math.tanh %88 : vector<8x128xf32>
    %cst_29 = arith.constant 5.000000e-01 : f32
    %90 = vector.broadcast %cst_29 : f32 to vector<8x128xf32>
    %91 = arith.mulf %90, %89 : vector<8x128xf32>
    %cst_30 = arith.constant 5.000000e-01 : f32
    %92 = vector.broadcast %cst_30 : f32 to vector<8x128xf32>
    %93 = arith.addf %91, %92 : vector<8x128xf32>
    %94 = arith.select %13, %89, %93 : vector<8x128xi1>, vector<8x128xf32>
    %95 = vector.extract_strided_slice %94 {offsets = [0, 0], sizes = [8, 32], strides = [1, 1]} : vector<8x128xf32> to vector<8x32xf32>
    %96 = vector.extract_strided_slice %94 {offsets = [0, 32], sizes = [8, 32], strides = [1, 1]} : vector<8x128xf32> to vector<8x32xf32>
    %97 = vector.extract_strided_slice %94 {offsets = [0, 64], sizes = [8, 32], strides = [1, 1]} : vector<8x128xf32> to vector<8x32xf32>
    %98 = vector.extract_strided_slice %94 {offsets = [0, 96], sizes = [8, 32], strides = [1, 1]} : vector<8x128xf32> to vector<8x32xf32>
    %99 = arith.mulf %96, %79 : vector<8x32xf32>
    %100 = arith.mulf %95, %97 : vector<8x32xf32>
    %101 = arith.addf %99, %100 : vector<8x32xf32>
    %102 = math.tanh %101 : vector<8x32xf32>
    %103 = arith.mulf %98, %102 : vector<8x32xf32>
    %c4_i32 = arith.constant 4 : i32
    %104 = arith.index_cast %c4_i32 : i32 to index
    %c0_31 = arith.constant 0 : index
    %105 = tpu.strided_load %arg7[%104, %c0_31] {strides = array<i32: 8, 1>} : memref<64x128xf32, #tpu.memory_space<vmem>>, vector<8x128xf32>
    %cst_32 = arith.constant dense<0.000000e+00> : vector<8x128xf32>
    %106 = tpu.matmul %103, %7, %cst_32 {dimension_numbers = #tpu.dot_dimension_numbers<[1], [0], [0], [1], [0, 0, 1, 1], [], []>} : vector<8x32xf32>, vector<32x128xf32>, vector<8x128xf32> -> vector<8x128xf32>
    %107 = arith.addf %105, %106 : vector<8x128xf32>
    %cst_33 = arith.constant 5.000000e-01 : f32
    %108 = vector.broadcast %cst_33 : f32 to vector<8x128xf32>
    %109 = arith.mulf %108, %107 : vector<8x128xf32>
    %110 = arith.select %13, %107, %109 : vector<8x128xi1>, vector<8x128xf32>
    %111 = math.tanh %110 : vector<8x128xf32>
    %cst_34 = arith.constant 5.000000e-01 : f32
    %112 = vector.broadcast %cst_34 : f32 to vector<8x128xf32>
    %113 = arith.mulf %112, %111 : vector<8x128xf32>
    %cst_35 = arith.constant 5.000000e-01 : f32
    %114 = vector.broadcast %cst_35 : f32 to vector<8x128xf32>
    %115 = arith.addf %113, %114 : vector<8x128xf32>
    %116 = arith.select %13, %111, %115 : vector<8x128xi1>, vector<8x128xf32>
    %117 = vector.extract_strided_slice %116 {offsets = [0, 0], sizes = [8, 32], strides = [1, 1]} : vector<8x128xf32> to vector<8x32xf32>
    %118 = vector.extract_strided_slice %116 {offsets = [0, 32], sizes = [8, 32], strides = [1, 1]} : vector<8x128xf32> to vector<8x32xf32>
    %119 = vector.extract_strided_slice %116 {offsets = [0, 64], sizes = [8, 32], strides = [1, 1]} : vector<8x128xf32> to vector<8x32xf32>
    %120 = vector.extract_strided_slice %116 {offsets = [0, 96], sizes = [8, 32], strides = [1, 1]} : vector<8x128xf32> to vector<8x32xf32>
    %121 = arith.mulf %118, %101 : vector<8x32xf32>
    %122 = arith.mulf %117, %119 : vector<8x32xf32>
    %123 = arith.addf %121, %122 : vector<8x32xf32>
    %124 = math.tanh %123 : vector<8x32xf32>
    %125 = arith.mulf %120, %124 : vector<8x32xf32>
    %c5_i32 = arith.constant 5 : i32
    %126 = arith.index_cast %c5_i32 : i32 to index
    %c0_36 = arith.constant 0 : index
    %127 = tpu.strided_load %arg7[%126, %c0_36] {strides = array<i32: 8, 1>} : memref<64x128xf32, #tpu.memory_space<vmem>>, vector<8x128xf32>
    %cst_37 = arith.constant dense<0.000000e+00> : vector<8x128xf32>
    %128 = tpu.matmul %125, %7, %cst_37 {dimension_numbers = #tpu.dot_dimension_numbers<[1], [0], [0], [1], [0, 0, 1, 1], [], []>} : vector<8x32xf32>, vector<32x128xf32>, vector<8x128xf32> -> vector<8x128xf32>
    %129 = arith.addf %127, %128 : vector<8x128xf32>
    %cst_38 = arith.constant 5.000000e-01 : f32
    %130 = vector.broadcast %cst_38 : f32 to vector<8x128xf32>
    %131 = arith.mulf %130, %129 : vector<8x128xf32>
    %132 = arith.select %13, %129, %131 : vector<8x128xi1>, vector<8x128xf32>
    %133 = math.tanh %132 : vector<8x128xf32>
    %cst_39 = arith.constant 5.000000e-01 : f32
    %134 = vector.broadcast %cst_39 : f32 to vector<8x128xf32>
    %135 = arith.mulf %134, %133 : vector<8x128xf32>
    %cst_40 = arith.constant 5.000000e-01 : f32
    %136 = vector.broadcast %cst_40 : f32 to vector<8x128xf32>
    %137 = arith.addf %135, %136 : vector<8x128xf32>
    %138 = arith.select %13, %133, %137 : vector<8x128xi1>, vector<8x128xf32>
    %139 = vector.extract_strided_slice %138 {offsets = [0, 0], sizes = [8, 32], strides = [1, 1]} : vector<8x128xf32> to vector<8x32xf32>
    %140 = vector.extract_strided_slice %138 {offsets = [0, 32], sizes = [8, 32], strides = [1, 1]} : vector<8x128xf32> to vector<8x32xf32>
    %141 = vector.extract_strided_slice %138 {offsets = [0, 64], sizes = [8, 32], strides = [1, 1]} : vector<8x128xf32> to vector<8x32xf32>
    %142 = vector.extract_strided_slice %138 {offsets = [0, 96], sizes = [8, 32], strides = [1, 1]} : vector<8x128xf32> to vector<8x32xf32>
    %143 = arith.mulf %140, %123 : vector<8x32xf32>
    %144 = arith.mulf %139, %141 : vector<8x32xf32>
    %145 = arith.addf %143, %144 : vector<8x32xf32>
    %146 = math.tanh %145 : vector<8x32xf32>
    %147 = arith.mulf %142, %146 : vector<8x32xf32>
    %c6_i32 = arith.constant 6 : i32
    %148 = arith.index_cast %c6_i32 : i32 to index
    %c0_41 = arith.constant 0 : index
    %149 = tpu.strided_load %arg7[%148, %c0_41] {strides = array<i32: 8, 1>} : memref<64x128xf32, #tpu.memory_space<vmem>>, vector<8x128xf32>
    %cst_42 = arith.constant dense<0.000000e+00> : vector<8x128xf32>
    %150 = tpu.matmul %147, %7, %cst_42 {dimension_numbers = #tpu.dot_dimension_numbers<[1], [0], [0], [1], [0, 0, 1, 1], [], []>} : vector<8x32xf32>, vector<32x128xf32>, vector<8x128xf32> -> vector<8x128xf32>
    %151 = arith.addf %149, %150 : vector<8x128xf32>
    %cst_43 = arith.constant 5.000000e-01 : f32
    %152 = vector.broadcast %cst_43 : f32 to vector<8x128xf32>
    %153 = arith.mulf %152, %151 : vector<8x128xf32>
    %154 = arith.select %13, %151, %153 : vector<8x128xi1>, vector<8x128xf32>
    %155 = math.tanh %154 : vector<8x128xf32>
    %cst_44 = arith.constant 5.000000e-01 : f32
    %156 = vector.broadcast %cst_44 : f32 to vector<8x128xf32>
    %157 = arith.mulf %156, %155 : vector<8x128xf32>
    %cst_45 = arith.constant 5.000000e-01 : f32
    %158 = vector.broadcast %cst_45 : f32 to vector<8x128xf32>
    %159 = arith.addf %157, %158 : vector<8x128xf32>
    %160 = arith.select %13, %155, %159 : vector<8x128xi1>, vector<8x128xf32>
    %161 = vector.extract_strided_slice %160 {offsets = [0, 0], sizes = [8, 32], strides = [1, 1]} : vector<8x128xf32> to vector<8x32xf32>
    %162 = vector.extract_strided_slice %160 {offsets = [0, 32], sizes = [8, 32], strides = [1, 1]} : vector<8x128xf32> to vector<8x32xf32>
    %163 = vector.extract_strided_slice %160 {offsets = [0, 64], sizes = [8, 32], strides = [1, 1]} : vector<8x128xf32> to vector<8x32xf32>
    %164 = vector.extract_strided_slice %160 {offsets = [0, 96], sizes = [8, 32], strides = [1, 1]} : vector<8x128xf32> to vector<8x32xf32>
    %165 = arith.mulf %162, %145 : vector<8x32xf32>
    %166 = arith.mulf %161, %163 : vector<8x32xf32>
    %167 = arith.addf %165, %166 : vector<8x32xf32>
    %168 = math.tanh %167 : vector<8x32xf32>
    %169 = arith.mulf %164, %168 : vector<8x32xf32>
    %c7_i32 = arith.constant 7 : i32
    %170 = arith.index_cast %c7_i32 : i32 to index
    %c0_46 = arith.constant 0 : index
    %171 = tpu.strided_load %arg7[%170, %c0_46] {strides = array<i32: 8, 1>} : memref<64x128xf32, #tpu.memory_space<vmem>>, vector<8x128xf32>
    %cst_47 = arith.constant dense<0.000000e+00> : vector<8x128xf32>
    %172 = tpu.matmul %169, %7, %cst_47 {dimension_numbers = #tpu.dot_dimension_numbers<[1], [0], [0], [1], [0, 0, 1, 1], [], []>} : vector<8x32xf32>, vector<32x128xf32>, vector<8x128xf32> -> vector<8x128xf32>
    %173 = arith.addf %171, %172 : vector<8x128xf32>
    %cst_48 = arith.constant 5.000000e-01 : f32
    %174 = vector.broadcast %cst_48 : f32 to vector<8x128xf32>
    %175 = arith.mulf %174, %173 : vector<8x128xf32>
    %176 = arith.select %13, %173, %175 : vector<8x128xi1>, vector<8x128xf32>
    %177 = math.tanh %176 : vector<8x128xf32>
    %cst_49 = arith.constant 5.000000e-01 : f32
    %178 = vector.broadcast %cst_49 : f32 to vector<8x128xf32>
    %179 = arith.mulf %178, %177 : vector<8x128xf32>
    %cst_50 = arith.constant 5.000000e-01 : f32
    %180 = vector.broadcast %cst_50 : f32 to vector<8x128xf32>
    %181 = arith.addf %179, %180 : vector<8x128xf32>
    %182 = arith.select %13, %177, %181 : vector<8x128xi1>, vector<8x128xf32>
    %183 = vector.extract_strided_slice %182 {offsets = [0, 0], sizes = [8, 32], strides = [1, 1]} : vector<8x128xf32> to vector<8x32xf32>
    %184 = vector.extract_strided_slice %182 {offsets = [0, 32], sizes = [8, 32], strides = [1, 1]} : vector<8x128xf32> to vector<8x32xf32>
    %185 = vector.extract_strided_slice %182 {offsets = [0, 64], sizes = [8, 32], strides = [1, 1]} : vector<8x128xf32> to vector<8x32xf32>
    %186 = vector.extract_strided_slice %182 {offsets = [0, 96], sizes = [8, 32], strides = [1, 1]} : vector<8x128xf32> to vector<8x32xf32>
    %187 = arith.mulf %184, %167 : vector<8x32xf32>
    %188 = arith.mulf %183, %185 : vector<8x32xf32>
    %189 = arith.addf %187, %188 : vector<8x32xf32>
    %190 = math.tanh %189 : vector<8x32xf32>
    %191 = arith.mulf %186, %190 : vector<8x32xf32>
    %c8_i32 = arith.constant 8 : i32
    %c0_51 = arith.constant 0 : index
    %c0_52 = arith.constant 0 : index
    %192 = vector.load %arg4[%c0_51, %c0_52] : memref<1x32xf32, #tpu.memory_space<vmem>>, vector<1x32xf32>
    %193 = vector.broadcast %192 : vector<1x32xf32> to vector<8x32xf32>
    %194 = arith.mulf %191, %193 : vector<8x32xf32>
    %cst_53 = arith.constant dense<0.000000e+00> : vector<8xf32>
    %195 = vector.multi_reduction <add>, %194, %cst_53 [1] : vector<8x32xf32> to vector<8xf32>
    %196 = vector.shape_cast %195 : vector<8xf32> to vector<8x1xf32>
    %c0_54 = arith.constant 0 : index
    %c0_55 = arith.constant 0 : index
    %197 = vector.load %arg5[%c0_54, %c0_55] : memref<1x1xf32, #tpu.memory_space<vmem>>, vector<1x1xf32>
    %198 = vector.broadcast %197 : vector<1x1xf32> to vector<8x1xf32>
    %199 = arith.addf %196, %198 : vector<8x1xf32>
    %c0_56 = arith.constant 0 : index
    %c0_57 = arith.constant 0 : index
    %200 = vector.load %arg6[%c0_56, %c0_57] : memref<8x1xf32, #tpu.memory_space<vmem>>, vector<8x1xf32>
    tpu.vector_store %arg6[%c0_56, %c0_57], %199 {strides = array<i32>} : memref<8x1xf32, #tpu.memory_space<vmem>>, vector<8x1xf32>,
    return
  }
}

</mosaic_0001>

<llo_original>
// kernel: tpu_custom_call.1
$region0: #{tpu_custom_call.1}
  #allocation0 [shape = 'u32[]', space=smem, size = 0x4, offset = 0x4, fixed_abs, tag = 'smem constant byte address 0x4 - core index']
  #allocation1 [shape = 'u32[144,128]{1,0:T(1,128)}', space=vmem, size = 0x12000, scoped, tag = 'internal scratch']
  #allocation2 [shape = 'f32[64,128]{1,0:T(8,128)}', space=vmem, size = 0x8000, scoped, tag = 'scratch operand']
  #allocation3 [shape = 'f32[1,1]{1,0:T(1,128)S(1)}', space=vmem, size = 0x200, scoped, tag = 'scoped memory for tpu_custom_call.1']
  %s0 = inlined_call_operand.vmem [shape: f32[64,4], index: 0, kind: input, shape index: {}]
  %s1 = inlined_call_operand.vmem [shape: f32[4,128], index: 1, kind: input, shape index: {}]
  %s2 = inlined_call_operand.vmem [shape: f32[32,128], index: 2, kind: input, shape index: {}]
  %s3 = inlined_call_operand.vmem [shape: f32[1,128], index: 3, kind: input, shape index: {}]
  %s4 = inlined_call_operand.vmem [shape: f32[1,32], index: 4, kind: input, shape index: {}]
  %s5 = inlined_call_operand.<no memory space> [shape: f32[1,1], index: 5, kind: input, shape index: {}]
  %s6 = inlined_call_operand.vmem [shape: f32[8,1], index: 6, kind: output, shape index: {}]
  %s7 = sld [smem:[#allocation0]]
  $region34: #{tpu_custom_call.1} parent=0
    _
  %s9 = ssub.s32 1, %s7
  %s10 = scalar_select 0, %s9, %s7
  %v11 = vstv %s5
  %12 = vst [vmem:[#allocation3] sm:$0x1] %v11
  // Predicated region
  $region2: #{tpu_custom_call.1} parent=0 // pred_check
    _
  $region3: #{tpu_custom_call.1} parent=0 // pred_check_branch
    %14 = sbr.rel (0) target = $region5
  $region4: #{tpu_custom_call.1} parent=0 // pred_region
    _
  $region5: #{tpu_custom_call.1} parent=0 // pred_fallthru
    _
  // Predicated region
  $region6: #{tpu_custom_call.1} parent=0 // pred_check
    _
  $region7: #{tpu_custom_call.1} parent=0 // pred_check_branch
    %16 = sbr.rel (0) target = $region9
  $region8: #{tpu_custom_call.1} parent=0 // pred_region
    _
  $region9: #{tpu_custom_call.1} parent=0 // pred_fallthru
    _
  // Predicated region
  $region10: #{tpu_custom_call.1} parent=0 // pred_check
    _
  $region11: #{tpu_custom_call.1} parent=0 // pred_check_branch
    %18 = sbr.rel (0) target = $region13
  $region12: #{tpu_custom_call.1} parent=0 // pred_region
    _
  $region13: #{tpu_custom_call.1} parent=0 // pred_fallthru
    _
  // Predicated region
  $region14: #{tpu_custom_call.1} parent=0 // pred_check
    _
  $region15: #{tpu_custom_call.1} parent=0 // pred_check_branch
    %20 = sbr.rel (0) target = $region17
  $region16: #{tpu_custom_call.1} parent=0 // pred_region
    _
  $region17: #{tpu_custom_call.1} parent=0 // pred_fallthru
    _
  // Predicated region
  $region18: #{tpu_custom_call.1} parent=0 // pred_check
    _
  $region19: #{tpu_custom_call.1} parent=0 // pred_check_branch
    %22 = sbr.rel (0) target = $region21
  $region20: #{tpu_custom_call.1} parent=0 // pred_region
    _
  $region21: #{tpu_custom_call.1} parent=0 // pred_fallthru
    _
  // Predicated region
  $region22: #{tpu_custom_call.1} parent=0 // pred_check
    _
  $region23: #{tpu_custom_call.1} parent=0 // pred_check_branch
    %24 = sbr.rel (0) target = $region25
  $region24: #{tpu_custom_call.1} parent=0 // pred_region
    _
  $region25: #{tpu_custom_call.1} parent=0 // pred_fallthru
    _
  %v25 = vld [vmem:[%s0] sm:$0xff]
  %v26 = vld [vmem:[%s0 + $0x8] sm:$0xff]
  %v27 = vld [vmem:[%s0 + $0x10] sm:$0xff]
  %v28 = vld [vmem:[%s0 + $0x18] sm:$0xff]
  %v29 = vld [vmem:[%s0 + $0x20] sm:$0xff]
  %v30 = vld [vmem:[%s0 + $0x28] sm:$0xff]
  %v31 = vld [vmem:[%s0 + $0x30] sm:$0xff]
  %v32 = vld [vmem:[%s0 + $0x38] sm:$0xff]
  %v33 = vld [vmem:[%s1] sm:$0xf]
  %v34 = vld [vmem:[%s3] sm:$0x1]
  %v36 = vlaneseq
  %v37 = vshrl.u32 %v36, 7
  %v38 = vsub.s32 0, %v37
  %v39 = vrot.slane %v34, %v38
  %vm41 = vcmask 31744
  %v43 = vsel %vm41, %v25, 0
  %v46 = vsel %vm41, %v26, 0
  %v49 = vsel %vm41, %v27, 0
  %v52 = vsel %vm41, %v28, 0
  %v55 = vsel %vm41, %v29, 0
  %v58 = vsel %vm41, %v30, 0
  %v61 = vsel %vm41, %v31, 0
  %v64 = vsel %vm41, %v32, 0
  %vm66 = vcmask 1043456
  %v68 = vsel %vm66, %v33, 0
  %70 = vmatprep.subr.mxu0 0.0
  %71 = vmatpush1.msra.mxu0 0.0
  %72 = vmatprep.subr.mxu0 0.0
  %73 = vmatpush1.msra.mxu0 0.0
  %74 = vmatprep.subr.mxu0 0.0
  %75 = vmatpush1.msra.mxu0 0.0
  %76 = vmatprep.subr.mxu0 0.0
  %77 = vmatpush1.msra.mxu0 0.0
  %78 = vmatprep.subr.mxu0 0.0
  %79 = vmatpush1.msra.mxu0 0.0
  %80 = vmatprep.subr.mxu0 0.0
  %81 = vmatpush1.msra.mxu0 0.0
  %82 = vmatprep.subr.mxu0 0.0
  %83 = vmatpush1.msra.mxu0 0.0
  %84 = vmatprep.subr.mxu0 0.0
  %85 = vmatpush1.msra.mxu0 0.0
  %86 = vmatprep.subr.mxu0 0.0
  %87 = vmatpush1.msra.mxu0 0.0
  %88 = vmatprep.subr.mxu0 0.0
  %89 = vmatpush1.msra.mxu0 0.0
  %90 = vmatprep.subr.mxu0 0.0
  %91 = vmatpush1.msra.mxu0 0.0
  %92 = vmatprep.subr.mxu0 0.0
  %93 = vmatpush1.msra.mxu0 0.0
  %94 = vmatprep.subr.mxu0 0.0
  %95 = vmatpush1.msra.mxu0 0.0
  %96 = vmatprep.subr.mxu0 0.0
  %97 = vmatpush1.msra.mxu0 0.0
  %98 = vmatprep.subr.mxu0 0.0
  %99 = vmatpush1.msra.mxu0 0.0
  %100 = vmatprep.subr.mxu0 0.0
  %101 = vmatpush1.msra.mxu0 %v68
  %102 = vmatprep.subr.mxu0 0.0
  %103 = vmatpush2.msra.mxu0 0.0
  %104 = vmatprep.subr.mxu0 0.0
  %105 = vmatpush2.msra.mxu0 0.0
  %106 = vmatprep.subr.mxu0 0.0
  %107 = vmatpush2.msra.mxu0 0.0
  %108 = vmatprep.subr.mxu0 0.0
  %109 = vmatpush2.msra.mxu0 0.0
  %110 = vmatprep.subr.mxu0 0.0
  %111 = vmatpush2.msra.mxu0 0.0
  %112 = vmatprep.subr.mxu0 0.0
  %113 = vmatpush2.msra.mxu0 0.0
  %114 = vmatprep.subr.mxu0 0.0
  %115 = vmatpush2.msra.mxu0 0.0
  %116 = vmatprep.subr.mxu0 0.0
  %117 = vmatpush2.msra.mxu0 0.0
  %118 = vmatprep.subr.mxu0 0.0
  %119 = vmatpush2.msra.mxu0 0.0
  %120 = vmatprep.subr.mxu0 0.0
  %121 = vmatpush2.msra.mxu0 0.0
  %122 = vmatprep.subr.mxu0 0.0
  %123 = vmatpush2.msra.mxu0 0.0
  %124 = vmatprep.subr.mxu0 0.0
  %125 = vmatpush2.msra.mxu0 0.0
  %126 = vmatprep.subr.mxu0 0.0
  %127 = vmatpush2.msra.mxu0 0.0
  %128 = vmatprep.subr.mxu0 0.0
  %129 = vmatpush2.msra.mxu0 0.0
  %130 = vmatprep.subr.mxu0 0.0
  %131 = vmatpush2.msra.mxu0 0.0
  %132 = vmatprep.subr.mxu0 0.0
  %133 = vmatpush2.msra.mxu0 0.0
  %134 = vmatprep.mubr.f32.mxu0 0.0
  %135 = vmatmul.mubr.f32.gmra.mxu0 %v43
  %v136 = vpop.f32.mrf.mxu0
  %v137 = vadd.f32 %v39, %v136
  %v138 = vpop.f32.mrf.mxu0
  %139 = vmatprep.mubr.f32.mxu0 0.0
  %140 = vmatmul.mubr.f32.gmra.mxu0 %v46
  %v141 = vpop.f32.mrf.mxu0
  %v142 = vadd.f32 %v39, %v141
  %v143 = vpop.f32.mrf.mxu0
  %144 = vmatprep.mubr.f32.mxu0 0.0
  %145 = vmatmul.mubr.f32.gmra.mxu0 %v49
  %v146 = vpop.f32.mrf.mxu0
  %v147 = vadd.f32 %v39, %v146
  %v148 = vpop.f32.mrf.mxu0
  %149 = vmatprep.mubr.f32.mxu0 0.0
  %150 = vmatmul.mubr.f32.gmra.mxu0 %v52
  %v151 = vpop.f32.mrf.mxu0
  %v152 = vadd.f32 %v39, %v151
  %v153 = vpop.f32.mrf.mxu0
  %154 = vmatprep.mubr.f32.mxu0 0.0
  %155 = vmatmul.mubr.f32.gmra.mxu0 %v55
  %v156 = vpop.f32.mrf.mxu0
  %v157 = vadd.f32 %v39, %v156
  %v158 = vpop.f32.mrf.mxu0
  %159 = vmatprep.mubr.f32.mxu0 0.0
  %160 = vmatmul.mubr.f32.gmra.mxu0 %v58
  %v161 = vpop.f32.mrf.mxu0
  %v162 = vadd.f32 %v39, %v161
  %v163 = vpop.f32.mrf.mxu0
  %164 = vmatprep.mubr.f32.mxu0 0.0
  %165 = vmatmul.mubr.f32.gmra.mxu0 %v61
  %v166 = vpop.f32.mrf.mxu0
  %v167 = vadd.f32 %v39, %v166
  %v168 = vpop.f32.mrf.mxu0
  %169 = vmatprep.mubr.f32.mxu0 0.0
  %170 = vmatmul.mubr.f32.gmra.mxu0 %v64
  %v171 = vpop.f32.mrf.mxu0
  %v172 = vadd.f32 %v39, %v171
  %v173 = vpop.f32.mrf.mxu0
  %174 = vdwg.mxu0
  %175 = vst [vmem:[#allocation2] sm:$0xff] %v137
  %176 = vst [vmem:[#allocation2 + $0x8] sm:$0xff] %v142
  %177 = vst [vmem:[#allocation2 + $0x10] sm:$0xff] %v147
  %178 = vst [vmem:[#allocation2 + $0x18] sm:$0xff] %v152
  %179 = vst [vmem:[#allocation2 + $0x20] sm:$0xff] %v157
  %180 = vst [vmem:[#allocation2 + $0x28] sm:$0xff] %v162
  %181 = vst [vmem:[#allocation2 + $0x30] sm:$0xff] %v167
  %182 = vst [vmem:[#allocation2 + $0x38] sm:$0xff] %v172
  %v183 = vld [vmem:[%s2] sm:$0xff]
  %v184 = vld [vmem:[%s2 + $0x8] sm:$0xff]
  %v185 = vld [vmem:[%s2 + $0x10] sm:$0xff]
  %v186 = vld [vmem:[%s2 + $0x18] sm:$0xff]
  %v187 = vlaneseq
  %v188 = vand.u32 %v187, 127
  %vm189 = vcmp.ge.s32.totalorder %v188, 64
  %vm190 = vcmp.lt.s32.totalorder %v188, 96
  %vm191 = vmand %vm189, %vm190
  %v192 = vld [vmem:[#allocation2] ss:$8 sm:$0xf]
  %v193 = vld [vmem:[#allocation2] ss:$8 sm:$0xf0]
  %v194 = vor.u32 %v192, %v193
  %vm195 = vcmask 261120
  %v197 = vsel %vm195, 0.0, 0
  %199 = vmatprep.subr.mxu0 0.0
  %200 = vmatpush1.msra.mxu0 0.0
  %201 = vmatprep.subr.mxu0 0.0
  %202 = vmatpush1.msra.mxu0 0.0
  %203 = vmatprep.subr.mxu0 0.0
  %204 = vmatpush1.msra.mxu0 0.0
  %205 = vmatprep.subr.mxu0 0.0
  %206 = vmatpush1.msra.mxu0 0.0
  %207 = vmatprep.subr.mxu0 0.0
  %208 = vmatpush1.msra.mxu0 0.0
  %209 = vmatprep.subr.mxu0 0.0
  %210 = vmatpush1.msra.mxu0 0.0
  %211 = vmatprep.subr.mxu0 0.0
  %212 = vmatpush1.msra.mxu0 0.0
  %213 = vmatprep.subr.mxu0 0.0
  %214 = vmatpush1.msra.mxu0 0.0
  %215 = vmatprep.subr.mxu0 0.0
  %216 = vmatpush1.msra.mxu0 0.0
  %217 = vmatprep.subr.mxu0 0.0
  %218 = vmatpush1.msra.mxu0 0.0
  %219 = vmatprep.subr.mxu0 0.0
  %220 = vmatpush1.msra.mxu0 0.0
  %221 = vmatprep.subr.mxu0 0.0
  %222 = vmatpush1.msra.mxu0 0.0
  %223 = vmatprep.subr.mxu0 0.0
  %224 = vmatpush1.msra.mxu0 %v186
  %225 = vmatprep.subr.mxu0 0.0
  %226 = vmatpush1.msra.mxu0 %v185
  %227 = vmatprep.subr.mxu0 0.0
  %228 = vmatpush1.msra.mxu0 %v184
  %229 = vmatprep.subr.mxu0 0.0
  %230 = vmatpush1.msra.mxu0 %v183
  %231 = vmatprep.subr.mxu0 0.0
  %232 = vmatpush2.msra.mxu0 0.0
  %233 = vmatprep.subr.mxu0 0.0
  %234 = vmatpush2.msra.mxu0 0.0
  %235 = vmatprep.subr.mxu0 0.0
  %236 = vmatpush2.msra.mxu0 0.0
  %237 = vmatprep.subr.mxu0 0.0
  %238 = vmatpush2.msra.mxu0 0.0
  %239 = vmatprep.subr.mxu0 0.0
  %240 = vmatpush2.msra.mxu0 0.0
  %241 = vmatprep.subr.mxu0 0.0
  %242 = vmatpush2.msra.mxu0 0.0
  %243 = vmatprep.subr.mxu0 0.0
  %244 = vmatpush2.msra.mxu0 0.0
  %245 = vmatprep.subr.mxu0 0.0
  %246 = vmatpush2.msra.mxu0 0.0
  %247 = vmatprep.subr.mxu0 0.0
  %248 = vmatpush2.msra.mxu0 0.0
  %249 = vmatprep.subr.mxu0 0.0
  %250 = vmatpush2.msra.mxu0 0.0
  %251 = vmatprep.subr.mxu0 0.0
  %252 = vmatpush2.msra.mxu0 0.0
  %253 = vmatprep.subr.mxu0 0.0
  %254 = vmatpush2.msra.mxu0 0.0
  %255 = vmatprep.subr.mxu0 0.0
  %256 = vmatpush2.msra.mxu0 0.0
  %257 = vmatprep.subr.mxu0 0.0
  %258 = vmatpush2.msra.mxu0 0.0
  %259 = vmatprep.subr.mxu0 0.0
  %260 = vmatpush2.msra.mxu0 0.0
  %261 = vmatprep.subr.mxu0 0.0
  %262 = vmatpush2.msra.mxu0 0.0
  %263 = vmatprep.mubr.f32.mxu0 0.0
  %264 = vmatmul.mubr.f32.gmra.mxu0 %v197
  %v265 = vpop.f32.mrf.mxu0
  %v266 = vadd.f32 0.0, %v265
  %v267 = vpop.f32.mrf.mxu0
  %268 = vdwg.mxu0
  %v269 = vadd.f32 %v194, %v266
  %v270 = vmul.f32 %v269, 0.5
  %v271 = vsel %vm191, %v269, %v270
  %v272 = vtanh.pop %v271
  %v273 = vmul.f32 %v272, 0.5
  %v274 = vadd.f32 %v273, 0.5
  %v275 = vsel %vm191, %v272, %v274
  %v276 = vmul.f32 %v275, 0.0
  %278 = vrot.lane.b32.xlu0 %v275, 64
  %v279 = vpop.permute.xlu0 %278
  %v281 = vmul.f32 %v275, %v279
  %283 = vrot.lane.b32.xlu0 %v281, 32
  %v284 = vpop.permute.xlu0 %283
  %v286 = vadd.f32 %v276, %v284
  %v287 = vtanh.pop %v286
  %289 = vrot.lane.b32.xlu0 %v287, 64
  %v290 = vpop.permute.xlu0 %289
  %v292 = vmul.f32 %v275, %v290
  %s293 = scalar_lea.vmem [#allocation2], 1
  %v294 = vld [vmem:[%s293] ss:$8 sm:$0xf]
  %v295 = vld [vmem:[%s293] ss:$8 sm:$0xf0]
  %v296 = vor.u32 %v294, %v295
  %298 = vrot.lane.b32.xlu0 %v292, 32
  %v299 = vpop.permute.xlu0 %298
  %v300 = vsel %vm195, %v299, 0
  %302 = vmatprep.subr.mxu0 0.0
  %303 = vmatpush1.msra.mxu0 0.0
  %304 = vmatprep.subr.mxu0 0.0
  %305 = vmatpush1.msra.mxu0 0.0
  %306 = vmatprep.subr.mxu0 0.0
  %307 = vmatpush1.msra.mxu0 0.0
  %308 = vmatprep.subr.mxu0 0.0
  %309 = vmatpush1.msra.mxu0 0.0
  %310 = vmatprep.subr.mxu0 0.0
  %311 = vmatpush1.msra.mxu0 0.0
  %312 = vmatprep.subr.mxu0 0.0
  %313 = vmatpush1.msra.mxu0 0.0
  %314 = vmatprep.subr.mxu0 0.0
  %315 = vmatpush1.msra.mxu0 0.0
  %316 = vmatprep.subr.mxu0 0.0
  %317 = vmatpush1.msra.mxu0 0.0
  %318 = vmatprep.subr.mxu0 0.0
  %319 = vmatpush1.msra.mxu0 0.0
  %320 = vmatprep.subr.mxu0 0.0
  %321 = vmatpush1.msra.mxu0 0.0
  %322 = vmatprep.subr.mxu0 0.0
  %323 = vmatpush1.msra.mxu0 0.0
  %324 = vmatprep.subr.mxu0 0.0
  %325 = vmatpush1.msra.mxu0 0.0
  %326 = vmatprep.subr.mxu0 0.0
  %327 = vmatpush1.msra.mxu0 %v186
  %328 = vmatprep.subr.mxu0 0.0
  %329 = vmatpush1.msra.mxu0 %v185
  %330 = vmatprep.subr.mxu0 0.0
  %331 = vmatpush1.msra.mxu0 %v184
  %332 = vmatprep.subr.mxu0 0.0
  %333 = vmatpush1.msra.mxu0 %v183
  %334 = vmatprep.subr.mxu0 0.0
  %335 = vmatpush2.msra.mxu0 0.0
  %336 = vmatprep.subr.mxu0 0.0
  %337 = vmatpush2.msra.mxu0 0.0
  %338 = vmatprep.subr.mxu0 0.0
  %339 = vmatpush2.msra.mxu0 0.0
  %340 = vmatprep.subr.mxu0 0.0
  %341 = vmatpush2.msra.mxu0 0.0
  %342 = vmatprep.subr.mxu0 0.0
  %343 = vmatpush2.msra.mxu0 0.0
  %344 = vmatprep.subr.mxu0 0.0
  %345 = vmatpush2.msra.mxu0 0.0
  %346 = vmatprep.subr.mxu0 0.0
  %347 = vmatpush2.msra.mxu0 0.0
  %348 = vmatprep.subr.mxu0 0.0
  %349 = vmatpush2.msra.mxu0 0.0
  %350 = vmatprep.subr.mxu0 0.0
  %351 = vmatpush2.msra.mxu0 0.0
  %352 = vmatprep.subr.mxu0 0.0
  %353 = vmatpush2.msra.mxu0 0.0
  %354 = vmatprep.subr.mxu0 0.0
  %355 = vmatpush2.msra.mxu0 0.0
  %356 = vmatprep.subr.mxu0 0.0
  %357 = vmatpush2.msra.mxu0 0.0
  %358 = vmatprep.subr.mxu0 0.0
  %359 = vmatpush2.msra.mxu0 0.0
  %360 = vmatprep.subr.mxu0 0.0
  %361 = vmatpush2.msra.mxu0 0.0
  %362 = vmatprep.subr.mxu0 0.0
  %363 = vmatpush2.msra.mxu0 0.0
  %364 = vmatprep.subr.mxu0 0.0
  %365 = vmatpush2.msra.mxu0 0.0
  %366 = vmatprep.mubr.f32.mxu0 0.0
  %367 = vmatmul.mubr.f32.gmra.mxu0 %v300
  %v368 = vpop.f32.mrf.mxu0
  %v369 = vadd.f32 0.0, %v368
  %v370 = vpop.f32.mrf.mxu0
  %371 = vdwg.mxu0
  %v372 = vadd.f32 %v296, %v369
  %v373 = vmul.f32 %v372, 0.5
  %v374 = vsel %vm191, %v372, %v373
  %v375 = vtanh.pop %v374
  %v376 = vmul.f32 %v375, 0.5
  %v377 = vadd.f32 %v376, 0.5
  %v378 = vsel %vm191, %v375, %v377
  %v379 = vmul.f32 %v378, %v286
  %381 = vrot.lane.b32.xlu0 %v378, 64
  %v382 = vpop.permute.xlu0 %381
  %v384 = vmul.f32 %v378, %v382
  %386 = vrot.lane.b32.xlu0 %v384, 32
  %v387 = vpop.permute.xlu0 %386
  %v389 = vadd.f32 %v379, %v387
  %v390 = vtanh.pop %v389
  %392 = vrot.lane.b32.xlu0 %v390, 64
  %v393 = vpop.permute.xlu0 %392
  %v395 = vmul.f32 %v378, %v393
  %s396 = scalar_lea.vmem [#allocation2], 2
  %v397 = vld [vmem:[%s396] ss:$8 sm:$0xf]
  %v398 = vld [vmem:[%s396] ss:$8 sm:$0xf0]
  %v399 = vor.u32 %v397, %v398
  %401 = vrot.lane.b32.xlu0 %v395, 32
  %v402 = vpop.permute.xlu0 %401
  %v403 = vsel %vm195, %v402, 0
  %405 = vmatprep.subr.mxu0 0.0
  %406 = vmatpush1.msra.mxu0 0.0
  %407 = vmatprep.subr.mxu0 0.0
  %408 = vmatpush1.msra.mxu0 0.0
  %409 = vmatprep.subr.mxu0 0.0
  %410 = vmatpush1.msra.mxu0 0.0
  %411 = vmatprep.subr.mxu0 0.0
  %412 = vmatpush1.msra.mxu0 0.0
  %413 = vmatprep.subr.mxu0 0.0
  %414 = vmatpush1.msra.mxu0 0.0
  %415 = vmatprep.subr.mxu0 0.0
  %416 = vmatpush1.msra.mxu0 0.0
  %417 = vmatprep.subr.mxu0 0.0
  %418 = vmatpush1.msra.mxu0 0.0
  %419 = vmatprep.subr.mxu0 0.0
  %420 = vmatpush1.msra.mxu0 0.0
  %421 = vmatprep.subr.mxu0 0.0
  %422 = vmatpush1.msra.mxu0 0.0
  %423 = vmatprep.subr.mxu0 0.0
  %424 = vmatpush1.msra.mxu0 0.0
  %425 = vmatprep.subr.mxu0 0.0
  %426 = vmatpush1.msra.mxu0 0.0
  %427 = vmatprep.subr.mxu0 0.0
  %428 = vmatpush1.msra.mxu0 0.0
  %429 = vmatprep.subr.mxu0 0.0
  %430 = vmatpush1.msra.mxu0 %v186
  %431 = vmatprep.subr.mxu0 0.0
  %432 = vmatpush1.msra.mxu0 %v185
  %433 = vmatprep.subr.mxu0 0.0
  %434 = vmatpush1.msra.mxu0 %v184
  %435 = vmatprep.subr.mxu0 0.0
  %436 = vmatpush1.msra.mxu0 %v183
  %437 = vmatprep.subr.mxu0 0.0
  %438 = vmatpush2.msra.mxu0 0.0
  %439 = vmatprep.subr.mxu0 0.0
  %440 = vmatpush2.msra.mxu0 0.0
  %441 = vmatprep.subr.mxu0 0.0
  %442 = vmatpush2.msra.mxu0 0.0
  %443 = vmatprep.subr.mxu0 0.0
  %444 = vmatpush2.msra.mxu0 0.0
  %445 = vmatprep.subr.mxu0 0.0
  %446 = vmatpush2.msra.mxu0 0.0
  %447 = vmatprep.subr.mxu0 0.0
  %448 = vmatpush2.msra.mxu0 0.0
  %449 = vmatprep.subr.mxu0 0.0
  %450 = vmatpush2.msra.mxu0 0.0
  %451 = vmatprep.subr.mxu0 0.0
  %452 = vmatpush2.msra.mxu0 0.0
  %453 = vmatprep.subr.mxu0 0.0
  %454 = vmatpush2.msra.mxu0 0.0
  %455 = vmatprep.subr.mxu0 0.0
  %456 = vmatpush2.msra.mxu0 0.0
  %457 = vmatprep.subr.mxu0 0.0
  %458 = vmatpush2.msra.mxu0 0.0
  %459 = vmatprep.subr.mxu0 0.0
  %460 = vmatpush2.msra.mxu0 0.0
  %461 = vmatprep.subr.mxu0 0.0
  %462 = vmatpush2.msra.mxu0 0.0
  %463 = vmatprep.subr.mxu0 0.0
  %464 = vmatpush2.msra.mxu0 0.0
  %465 = vmatprep.subr.mxu0 0.0
  %466 = vmatpush2.msra.mxu0 0.0
  %467 = vmatprep.subr.mxu0 0.0
  %468 = vmatpush2.msra.mxu0 0.0
  %469 = vmatprep.mubr.f32.mxu0 0.0
  %470 = vmatmul.mubr.f32.gmra.mxu0 %v403
  %v471 = vpop.f32.mrf.mxu0
  %v472 = vadd.f32 0.0, %v471
  %v473 = vpop.f32.mrf.mxu0
  %474 = vdwg.mxu0
  %v475 = vadd.f32 %v399, %v472
  %v476 = vmul.f32 %v475, 0.5
  %v477 = vsel %vm191, %v475, %v476
  %v478 = vtanh.pop %v477
  %v479 = vmul.f32 %v478, 0.5
  %v480 = vadd.f32 %v479, 0.5
  %v481 = vsel %vm191, %v478, %v480
  %v482 = vmul.f32 %v481, %v389
  %484 = vrot.lane.b32.xlu0 %v481, 64
  %v485 = vpop.permute.xlu0 %484
  %v487 = vmul.f32 %v481, %v485
  %489 = vrot.lane.b32.xlu0 %v487, 32
  %v490 = vpop.permute.xlu0 %489
  %v492 = vadd.f32 %v482, %v490
  %v493 = vtanh.pop %v492
  %495 = vrot.lane.b32.xlu0 %v493, 64
  %v496 = vpop.permute.xlu0 %495
  %v498 = vmul.f32 %v481, %v496
  %s499 = scalar_lea.vmem [#allocation2], 3
  %v500 = vld [vmem:[%s499] ss:$8 sm:$0xf]
  %v501 = vld [vmem:[%s499] ss:$8 sm:$0xf0]
  %v502 = vor.u32 %v500, %v501
  %504 = vrot.lane.b32.xlu0 %v498, 32
  %v505 = vpop.permute.xlu0 %504
  %v506 = vsel %vm195, %v505, 0
  %508 = vmatprep.subr.mxu0 0.0
  %509 = vmatpush1.msra.mxu0 0.0
  %510 = vmatprep.subr.mxu0 0.0
  %511 = vmatpush1.msra.mxu0 0.0
  %512 = vmatprep.subr.mxu0 0.0
  %513 = vmatpush1.msra.mxu0 0.0
  %514 = vmatprep.subr.mxu0 0.0
  %515 = vmatpush1.msra.mxu0 0.0
  %516 = vmatprep.subr.mxu0 0.0
  %517 = vmatpush1.msra.mxu0 0.0
  %518 = vmatprep.subr.mxu0 0.0
  %519 = vmatpush1.msra.mxu0 0.0
  %520 = vmatprep.subr.mxu0 0.0
  %521 = vmatpush1.msra.mxu0 0.0
  %522 = vmatprep.subr.mxu0 0.0
  %523 = vmatpush1.msra.mxu0 0.0
  %524 = vmatprep.subr.mxu0 0.0
  %525 = vmatpush1.msra.mxu0 0.0
  %526 = vmatprep.subr.mxu0 0.0
  %527 = vmatpush1.msra.mxu0 0.0
  %528 = vmatprep.subr.mxu0 0.0
  %529 = vmatpush1.msra.mxu0 0.0
  %530 = vmatprep.subr.mxu0 0.0
  %531 = vmatpush1.msra.mxu0 0.0
  %532 = vmatprep.subr.mxu0 0.0
  %533 = vmatpush1.msra.mxu0 %v186
  %534 = vmatprep.subr.mxu0 0.0
  %535 = vmatpush1.msra.mxu0 %v185
  %536 = vmatprep.subr.mxu0 0.0
  %537 = vmatpush1.msra.mxu0 %v184
  %538 = vmatprep.subr.mxu0 0.0
  %539 = vmatpush1.msra.mxu0 %v183
  %540 = vmatprep.subr.mxu0 0.0
  %541 = vmatpush2.msra.mxu0 0.0
  %542 = vmatprep.subr.mxu0 0.0
  %543 = vmatpush2.msra.mxu0 0.0
  %544 = vmatprep.subr.mxu0 0.0
  %545 = vmatpush2.msra.mxu0 0.0
  %546 = vmatprep.subr.mxu0 0.0
  %547 = vmatpush2.msra.mxu0 0.0
  %548 = vmatprep.subr.mxu0 0.0
  %549 = vmatpush2.msra.mxu0 0.0
  %550 = vmatprep.subr.mxu0 0.0
  %551 = vmatpush2.msra.mxu0 0.0
  %552 = vmatprep.subr.mxu0 0.0
  %553 = vmatpush2.msra.mxu0 0.0
  %554 = vmatprep.subr.mxu0 0.0
  %555 = vmatpush2.msra.mxu0 0.0
  %556 = vmatprep.subr.mxu0 0.0
  %557 = vmatpush2.msra.mxu0 0.0
  %558 = vmatprep.subr.mxu0 0.0
  %559 = vmatpush2.msra.mxu0 0.0
  %560 = vmatprep.subr.mxu0 0.0
  %561 = vmatpush2.msra.mxu0 0.0
  %562 = vmatprep.subr.mxu0 0.0
  %563 = vmatpush2.msra.mxu0 0.0
  %564 = vmatprep.subr.mxu0 0.0
  %565 = vmatpush2.msra.mxu0 0.0
  %566 = vmatprep.subr.mxu0 0.0
  %567 = vmatpush2.msra.mxu0 0.0
  %568 = vmatprep.subr.mxu0 0.0
  %569 = vmatpush2.msra.mxu0 0.0
  %570 = vmatprep.subr.mxu0 0.0
  %571 = vmatpush2.msra.mxu0 0.0
  %572 = vmatprep.mubr.f32.mxu0 0.0
  %573 = vmatmul.mubr.f32.gmra.mxu0 %v506
  %v574 = vpop.f32.mrf.mxu0
  %v575 = vadd.f32 0.0, %v574
  %v576 = vpop.f32.mrf.mxu0
  %577 = vdwg.mxu0
  %v578 = vadd.f32 %v502, %v575
  %v579 = vmul.f32 %v578, 0.5
  %v580 = vsel %vm191, %v578, %v579
  %v581 = vtanh.pop %v580
  %v582 = vmul.f32 %v581, 0.5
  %v583 = vadd.f32 %v582, 0.5
  %v584 = vsel %vm191, %v581, %v583
  %v585 = vmul.f32 %v584, %v492
  %587 = vrot.lane.b32.xlu0 %v584, 64
  %v588 = vpop.permute.xlu0 %587
  %v590 = vmul.f32 %v584, %v588
  %592 = vrot.lane.b32.xlu0 %v590, 32
  %v593 = vpop.permute.xlu0 %592
  %v595 = vadd.f32 %v585, %v593
  %v596 = vtanh.pop %v595
  %598 = vrot.lane.b32.xlu0 %v596, 64
  %v599 = vpop.permute.xlu0 %598
  %v601 = vmul.f32 %v584, %v599
  %s602 = scalar_lea.vmem [#allocation2], 4
  %v603 = vld [vmem:[%s602] ss:$8 sm:$0xf]
  %v604 = vld [vmem:[%s602] ss:$8 sm:$0xf0]
  %v605 = vor.u32 %v603, %v604
  %607 = vrot.lane.b32.xlu0 %v601, 32
  %v608 = vpop.permute.xlu0 %607
  %v609 = vsel %vm195, %v608, 0
  %611 = vmatprep.subr.mxu0 0.0
  %612 = vmatpush1.msra.mxu0 0.0
  %613 = vmatprep.subr.mxu0 0.0
  %614 = vmatpush1.msra.mxu0 0.0
  %615 = vmatprep.subr.mxu0 0.0
  %616 = vmatpush1.msra.mxu0 0.0
  %617 = vmatprep.subr.mxu0 0.0
  %618 = vmatpush1.msra.mxu0 0.0
  %619 = vmatprep.subr.mxu0 0.0
  %620 = vmatpush1.msra.mxu0 0.0
  %621 = vmatprep.subr.mxu0 0.0
  %622 = vmatpush1.msra.mxu0 0.0
  %623 = vmatprep.subr.mxu0 0.0
  %624 = vmatpush1.msra.mxu0 0.0
  %625 = vmatprep.subr.mxu0 0.0
  %626 = vmatpush1.msra.mxu0 0.0
  %627 = vmatprep.subr.mxu0 0.0
  %628 = vmatpush1.msra.mxu0 0.0
  %629 = vmatprep.subr.mxu0 0.0
  %630 = vmatpush1.msra.mxu0 0.0
  %631 = vmatprep.subr.mxu0 0.0
  %632 = vmatpush1.msra.mxu0 0.0
  %633 = vmatprep.subr.mxu0 0.0
  %634 = vmatpush1.msra.mxu0 0.0
  %635 = vmatprep.subr.mxu0 0.0
  %636 = vmatpush1.msra.mxu0 %v186
  %637 = vmatprep.subr.mxu0 0.0
  %638 = vmatpush1.msra.mxu0 %v185
  %639 = vmatprep.subr.mxu0 0.0
  %640 = vmatpush1.msra.mxu0 %v184
  %641 = vmatprep.subr.mxu0 0.0
  %642 = vmatpush1.msra.mxu0 %v183
  %643 = vmatprep.subr.mxu0 0.0
  %644 = vmatpush2.msra.mxu0 0.0
  %645 = vmatprep.subr.mxu0 0.0
  %646 = vmatpush2.msra.mxu0 0.0
  %647 = vmatprep.subr.mxu0 0.0
  %648 = vmatpush2.msra.mxu0 0.0
  %649 = vmatprep.subr.mxu0 0.0
  %650 = vmatpush2.msra.mxu0 0.0
  %651 = vmatprep.subr.mxu0 0.0
  %652 = vmatpush2.msra.mxu0 0.0
  %653 = vmatprep.subr.mxu0 0.0
  %654 = vmatpush2.msra.mxu0 0.0
  %655 = vmatprep.subr.mxu0 0.0
  %656 = vmatpush2.msra.mxu0 0.0
  %657 = vmatprep.subr.mxu0 0.0
  %658 = vmatpush2.msra.mxu0 0.0
  %659 = vmatprep.subr.mxu0 0.0
  %660 = vmatpush2.msra.mxu0 0.0
  %661 = vmatprep.subr.mxu0 0.0
  %662 = vmatpush2.msra.mxu0 0.0
  %663 = vmatprep.subr.mxu0 0.0
  %664 = vmatpush2.msra.mxu0 0.0
  %665 = vmatprep.subr.mxu0 0.0
  %666 = vmatpush2.msra.mxu0 0.0
  %667 = vmatprep.subr.mxu0 0.0
  %668 = vmatpush2.msra.mxu0 0.0
  %669 = vmatprep.subr.mxu0 0.0
  %670 = vmatpush2.msra.mxu0 0.0
  %671 = vmatprep.subr.mxu0 0.0
  %672 = vmatpush2.msra.mxu0 0.0
  %673 = vmatprep.subr.mxu0 0.0
  %674 = vmatpush2.msra.mxu0 0.0
  %675 = vmatprep.mubr.f32.mxu0 0.0
  %676 = vmatmul.mubr.f32.gmra.mxu0 %v609
  %v677 = vpop.f32.mrf.mxu0
  %v678 = vadd.f32 0.0, %v677
  %v679 = vpop.f32.mrf.mxu0
  %680 = vdwg.mxu0
  %v681 = vadd.f32 %v605, %v678
  %v682 = vmul.f32 %v681, 0.5
  %v683 = vsel %vm191, %v681, %v682
  %v684 = vtanh.pop %v683
  %v685 = vmul.f32 %v684, 0.5
  %v686 = vadd.f32 %v685, 0.5
  %v687 = vsel %vm191, %v684, %v686
  %v688 = vmul.f32 %v687, %v595
  %690 = vrot.lane.b32.xlu0 %v687, 64
  %v691 = vpop.permute.xlu0 %690
  %v693 = vmul.f32 %v687, %v691
  %695 = vrot.lane.b32.xlu0 %v693, 32
  %v696 = vpop.permute.xlu0 %695
  %v698 = vadd.f32 %v688, %v696
  %v699 = vtanh.pop %v698
  %701 = vrot.lane.b32.xlu0 %v699, 64
  %v702 = vpop.permute.xlu0 %701
  %v704 = vmul.f32 %v687, %v702
  %s705 = scalar_lea.vmem [#allocation2], 5
  %v706 = vld [vmem:[%s705] ss:$8 sm:$0xf]
  %v707 = vld [vmem:[%s705] ss:$8 sm:$0xf0]
  %v708 = vor.u32 %v706, %v707
  %710 = vrot.lane.b32.xlu0 %v704, 32
  %v711 = vpop.permute.xlu0 %710
  %v712 = vsel %vm195, %v711, 0
  %714 = vmatprep.subr.mxu0 0.0
  %715 = vmatpush1.msra.mxu0 0.0
  %716 = vmatprep.subr.mxu0 0.0
  %717 = vmatpush1.msra.mxu0 0.0
  %718 = vmatprep.subr.mxu0 0.0
  %719 = vmatpush1.msra.mxu0 0.0
  %720 = vmatprep.subr.mxu0 0.0
  %721 = vmatpush1.msra.mxu0 0.0
  %722 = vmatprep.subr.mxu0 0.0
  %723 = vmatpush1.msra.mxu0 0.0
  %724 = vmatprep.subr.mxu0 0.0
  %725 = vmatpush1.msra.mxu0 0.0
  %726 = vmatprep.subr.mxu0 0.0
  %727 = vmatpush1.msra.mxu0 0.0
  %728 = vmatprep.subr.mxu0 0.0
  %729 = vmatpush1.msra.mxu0 0.0
  %730 = vmatprep.subr.mxu0 0.0
  %731 = vmatpush1.msra.mxu0 0.0
  %732 = vmatprep.subr.mxu0 0.0
  %733 = vmatpush1.msra.mxu0 0.0
  %734 = vmatprep.subr.mxu0 0.0
  %735 = vmatpush1.msra.mxu0 0.0
  %736 = vmatprep.subr.mxu0 0.0
  %737 = vmatpush1.msra.mxu0 0.0
  %738 = vmatprep.subr.mxu0 0.0
  %739 = vmatpush1.msra.mxu0 %v186
  %740 = vmatprep.subr.mxu0 0.0
  %741 = vmatpush1.msra.mxu0 %v185
  %742 = vmatprep.subr.mxu0 0.0
  %743 = vmatpush1.msra.mxu0 %v184
  %744 = vmatprep.subr.mxu0 0.0
  %745 = vmatpush1.msra.mxu0 %v183
  %746 = vmatprep.subr.mxu0 0.0
  %747 = vmatpush2.msra.mxu0 0.0
  %748 = vmatprep.subr.mxu0 0.0
  %749 = vmatpush2.msra.mxu0 0.0
  %750 = vmatprep.subr.mxu0 0.0
  %751 = vmatpush2.msra.mxu0 0.0
  %752 = vmatprep.subr.mxu0 0.0
  %753 = vmatpush2.msra.mxu0 0.0
  %754 = vmatprep.subr.mxu0 0.0
  %755 = vmatpush2.msra.mxu0 0.0
  %756 = vmatprep.subr.mxu0 0.0
  %757 = vmatpush2.msra.mxu0 0.0
  %758 = vmatprep.subr.mxu0 0.0
  %759 = vmatpush2.msra.mxu0 0.0
  %760 = vmatprep.subr.mxu0 0.0
  %761 = vmatpush2.msra.mxu0 0.0
  %762 = vmatprep.subr.mxu0 0.0
  %763 = vmatpush2.msra.mxu0 0.0
  %764 = vmatprep.subr.mxu0 0.0
  %765 = vmatpush2.msra.mxu0 0.0
  %766 = vmatprep.subr.mxu0 0.0
  %767 = vmatpush2.msra.mxu0 0.0
  %768 = vmatprep.subr.mxu0 0.0
  %769 = vmatpush2.msra.mxu0 0.0
  %770 = vmatprep.subr.mxu0 0.0
  %771 = vmatpush2.msra.mxu0 0.0
  %772 = vmatprep.subr.mxu0 0.0
  %773 = vmatpush2.msra.mxu0 0.0
  %774 = vmatprep.subr.mxu0 0.0
  %775 = vmatpush2.msra.mxu0 0.0
  %776 = vmatprep.subr.mxu0 0.0
  %777 = vmatpush2.msra.mxu0 0.0
  %778 = vmatprep.mubr.f32.mxu0 0.0
  %779 = vmatmul.mubr.f32.gmra.mxu0 %v712
  %v780 = vpop.f32.mrf.mxu0
  %v781 = vadd.f32 0.0, %v780
  %v782 = vpop.f32.mrf.mxu0
  %783 = vdwg.mxu0
  %v784 = vadd.f32 %v708, %v781
  %v785 = vmul.f32 %v784, 0.5
  %v786 = vsel %vm191, %v784, %v785
  %v787 = vtanh.pop %v786
  %v788 = vmul.f32 %v787, 0.5
  %v789 = vadd.f32 %v788, 0.5
  %v790 = vsel %vm191, %v787, %v789
  %v791 = vmul.f32 %v790, %v698
  %793 = vrot.lane.b32.xlu0 %v790, 64
  %v794 = vpop.permute.xlu0 %793
  %v796 = vmul.f32 %v790, %v794
  %798 = vrot.lane.b32.xlu0 %v796, 32
  %v799 = vpop.permute.xlu0 %798
  %v801 = vadd.f32 %v791, %v799
  %v802 = vtanh.pop %v801
  %804 = vrot.lane.b32.xlu0 %v802, 64
  %v805 = vpop.permute.xlu0 %804
  %v807 = vmul.f32 %v790, %v805
  %s808 = scalar_lea.vmem [#allocation2], 6
  %v809 = vld [vmem:[%s808] ss:$8 sm:$0xf]
  %v810 = vld [vmem:[%s808] ss:$8 sm:$0xf0]
  %v811 = vor.u32 %v809, %v810
  %813 = vrot.lane.b32.xlu0 %v807, 32
  %v814 = vpop.permute.xlu0 %813
  %v815 = vsel %vm195, %v814, 0
  %817 = vmatprep.subr.mxu0 0.0
  %818 = vmatpush1.msra.mxu0 0.0
  %819 = vmatprep.subr.mxu0 0.0
  %820 = vmatpush1.msra.mxu0 0.0
  %821 = vmatprep.subr.mxu0 0.0
  %822 = vmatpush1.msra.mxu0 0.0
  %823 = vmatprep.subr.mxu0 0.0
  %824 = vmatpush1.msra.mxu0 0.0
  %825 = vmatprep.subr.mxu0 0.0
  %826 = vmatpush1.msra.mxu0 0.0
  %827 = vmatprep.subr.mxu0 0.0
  %828 = vmatpush1.msra.mxu0 0.0
  %829 = vmatprep.subr.mxu0 0.0
  %830 = vmatpush1.msra.mxu0 0.0
  %831 = vmatprep.subr.mxu0 0.0
  %832 = vmatpush1.msra.mxu0 0.0
  %833 = vmatprep.subr.mxu0 0.0
  %834 = vmatpush1.msra.mxu0 0.0
  %835 = vmatprep.subr.mxu0 0.0
  %836 = vmatpush1.msra.mxu0 0.0
  %837 = vmatprep.subr.mxu0 0.0
  %838 = vmatpush1.msra.mxu0 0.0
  %839 = vmatprep.subr.mxu0 0.0
  %840 = vmatpush1.msra.mxu0 0.0
  %841 = vmatprep.subr.mxu0 0.0
  %842 = vmatpush1.msra.mxu0 %v186
  %843 = vmatprep.subr.mxu0 0.0
  %844 = vmatpush1.msra.mxu0 %v185
  %845 = vmatprep.subr.mxu0 0.0
  %846 = vmatpush1.msra.mxu0 %v184
  %847 = vmatprep.subr.mxu0 0.0
  %848 = vmatpush1.msra.mxu0 %v183
  %849 = vmatprep.subr.mxu0 0.0
  %850 = vmatpush2.msra.mxu0 0.0
  %851 = vmatprep.subr.mxu0 0.0
  %852 = vmatpush2.msra.mxu0 0.0
  %853 = vmatprep.subr.mxu0 0.0
  %854 = vmatpush2.msra.mxu0 0.0
  %855 = vmatprep.subr.mxu0 0.0
  %856 = vmatpush2.msra.mxu0 0.0
  %857 = vmatprep.subr.mxu0 0.0
  %858 = vmatpush2.msra.mxu0 0.0
  %859 = vmatprep.subr.mxu0 0.0
  %860 = vmatpush2.msra.mxu0 0.0
  %861 = vmatprep.subr.mxu0 0.0
  %862 = vmatpush2.msra.mxu0 0.0
  %863 = vmatprep.subr.mxu0 0.0
  %864 = vmatpush2.msra.mxu0 0.0
  %865 = vmatprep.subr.mxu0 0.0
  %866 = vmatpush2.msra.mxu0 0.0
  %867 = vmatprep.subr.mxu0 0.0
  %868 = vmatpush2.msra.mxu0 0.0
  %869 = vmatprep.subr.mxu0 0.0
  %870 = vmatpush2.msra.mxu0 0.0
  %871 = vmatprep.subr.mxu0 0.0
  %872 = vmatpush2.msra.mxu0 0.0
  %873 = vmatprep.subr.mxu0 0.0
  %874 = vmatpush2.msra.mxu0 0.0
  %875 = vmatprep.subr.mxu0 0.0
  %876 = vmatpush2.msra.mxu0 0.0
  %877 = vmatprep.subr.mxu0 0.0
  %878 = vmatpush2.msra.mxu0 0.0
  %879 = vmatprep.subr.mxu0 0.0
  %880 = vmatpush2.msra.mxu0 0.0
  %881 = vmatprep.mubr.f32.mxu0 0.0
  %882 = vmatmul.mubr.f32.gmra.mxu0 %v815
  %v883 = vpop.f32.mrf.mxu0
  %v884 = vadd.f32 0.0, %v883
  %v885 = vpop.f32.mrf.mxu0
  %886 = vdwg.mxu0
  %v887 = vadd.f32 %v811, %v884
  %v888 = vmul.f32 %v887, 0.5
  %v889 = vsel %vm191, %v887, %v888
  %v890 = vtanh.pop %v889
  %v891 = vmul.f32 %v890, 0.5
  %v892 = vadd.f32 %v891, 0.5
  %v893 = vsel %vm191, %v890, %v892
  %v894 = vmul.f32 %v893, %v801
  %896 = vrot.lane.b32.xlu0 %v893, 64
  %v897 = vpop.permute.xlu0 %896
  %v899 = vmul.f32 %v893, %v897
  %901 = vrot.lane.b32.xlu0 %v899, 32
  %v902 = vpop.permute.xlu0 %901
  %v904 = vadd.f32 %v894, %v902
  %v905 = vtanh.pop %v904
  %907 = vrot.lane.b32.xlu0 %v905, 64
  %v908 = vpop.permute.xlu0 %907
  %v910 = vmul.f32 %v893, %v908
  %s911 = scalar_lea.vmem [#allocation2], 7
  %v912 = vld [vmem:[%s911] ss:$8 sm:$0xf]
  %v913 = vld [vmem:[%s911] ss:$8 sm:$0xf0]
  %v914 = vor.u32 %v912, %v913
  %916 = vrot.lane.b32.xlu0 %v910, 32
  %v917 = vpop.permute.xlu0 %916
  %v918 = vsel %vm195, %v917, 0
  %920 = vmatprep.subr.mxu0 0.0
  %921 = vmatpush1.msra.mxu0 0.0
  %922 = vmatprep.subr.mxu0 0.0
  %923 = vmatpush1.msra.mxu0 0.0
  %924 = vmatprep.subr.mxu0 0.0
  %925 = vmatpush1.msra.mxu0 0.0
  %926 = vmatprep.subr.mxu0 0.0
  %927 = vmatpush1.msra.mxu0 0.0
  %928 = vmatprep.subr.mxu0 0.0
  %929 = vmatpush1.msra.mxu0 0.0
  %930 = vmatprep.subr.mxu0 0.0
  %931 = vmatpush1.msra.mxu0 0.0
  %932 = vmatprep.subr.mxu0 0.0
  %933 = vmatpush1.msra.mxu0 0.0
  %934 = vmatprep.subr.mxu0 0.0
  %935 = vmatpush1.msra.mxu0 0.0
  %936 = vmatprep.subr.mxu0 0.0
  %937 = vmatpush1.msra.mxu0 0.0
  %938 = vmatprep.subr.mxu0 0.0
  %939 = vmatpush1.msra.mxu0 0.0
  %940 = vmatprep.subr.mxu0 0.0
  %941 = vmatpush1.msra.mxu0 0.0
  %942 = vmatprep.subr.mxu0 0.0
  %943 = vmatpush1.msra.mxu0 0.0
  %944 = vmatprep.subr.mxu0 0.0
  %945 = vmatpush1.msra.mxu0 %v186
  %946 = vmatprep.subr.mxu0 0.0
  %947 = vmatpush1.msra.mxu0 %v185
  %948 = vmatprep.subr.mxu0 0.0
  %949 = vmatpush1.msra.mxu0 %v184
  %950 = vmatprep.subr.mxu0 0.0
  %951 = vmatpush1.msra.mxu0 %v183
  %952 = vmatprep.subr.mxu0 0.0
  %953 = vmatpush2.msra.mxu0 0.0
  %954 = vmatprep.subr.mxu0 0.0
  %955 = vmatpush2.msra.mxu0 0.0
  %956 = vmatprep.subr.mxu0 0.0
  %957 = vmatpush2.msra.mxu0 0.0
  %958 = vmatprep.subr.mxu0 0.0
  %959 = vmatpush2.msra.mxu0 0.0
  %960 = vmatprep.subr.mxu0 0.0
  %961 = vmatpush2.msra.mxu0 0.0
  %962 = vmatprep.subr.mxu0 0.0
  %963 = vmatpush2.msra.mxu0 0.0
  %964 = vmatprep.subr.mxu0 0.0
  %965 = vmatpush2.msra.mxu0 0.0
  %966 = vmatprep.subr.mxu0 0.0
  %967 = vmatpush2.msra.mxu0 0.0
  %968 = vmatprep.subr.mxu0 0.0
  %969 = vmatpush2.msra.mxu0 0.0
  %970 = vmatprep.subr.mxu0 0.0
  %971 = vmatpush2.msra.mxu0 0.0
  %972 = vmatprep.subr.mxu0 0.0
  %973 = vmatpush2.msra.mxu0 0.0
  %974 = vmatprep.subr.mxu0 0.0
  %975 = vmatpush2.msra.mxu0 0.0
  %976 = vmatprep.subr.mxu0 0.0
  %977 = vmatpush2.msra.mxu0 0.0
  %978 = vmatprep.subr.mxu0 0.0
  %979 = vmatpush2.msra.mxu0 0.0
  %980 = vmatprep.subr.mxu0 0.0
  %981 = vmatpush2.msra.mxu0 0.0
  %982 = vmatprep.subr.mxu0 0.0
  %983 = vmatpush2.msra.mxu0 0.0
  %984 = vmatprep.mubr.f32.mxu0 0.0
  %985 = vmatmul.mubr.f32.gmra.mxu0 %v918
  %v986 = vpop.f32.mrf.mxu0
  %v987 = vadd.f32 0.0, %v986
  %v988 = vpop.f32.mrf.mxu0
  %989 = vdwg.mxu0
  %v990 = vadd.f32 %v914, %v987
  %v991 = vmul.f32 %v990, 0.5
  %v992 = vsel %vm191, %v990, %v991
  %v993 = vtanh.pop %v992
  %v994 = vmul.f32 %v993, 0.5
  %v995 = vadd.f32 %v994, 0.5
  %v996 = vsel %vm191, %v993, %v995
  %v997 = vmul.f32 %v996, %v904
  %999 = vrot.lane.b32.xlu0 %v996, 64
  %v1000 = vpop.permute.xlu0 %999
  %v1002 = vmul.f32 %v996, %v1000
  %1004 = vrot.lane.b32.xlu0 %v1002, 32
  %v1005 = vpop.permute.xlu0 %1004
  %v1007 = vadd.f32 %v997, %v1005
  %v1008 = vtanh.pop %v1007
  %1010 = vrot.lane.b32.xlu0 %v1008, 64
  %v1011 = vpop.permute.xlu0 %1010
  %v1013 = vmul.f32 %v996, %v1011
  %v1014 = vld [vmem:[%s4] sm:$0x1]
  %v1016 = vlaneseq
  %v1017 = vshrl.u32 %v1016, 7
  %v1018 = vsub.s32 0, %v1017
  %v1019 = vrot.slane %v1014, %v1018
  %1020 = vrot.lane.b32.xlu0 %v1019, 96
  %v1021 = vpop.permute.xlu0 %1020
  %v1023 = vmul.f32 %v1013, %v1021
  %1025 = vrot.lane.b32.xlu0 %v1023, 32
  %v1026 = vpop.permute.xlu0 %1025
  %v1028 = vsel %vm195, %v1026, 0.0
  %1029 = vadd.xlane.f32.xlu0 %v1028
  %v1030 = vpop.xlane.xlu0 %1029
  %v1031 = vld [vmem:[#allocation3] sm:$0x1]
  %v1033 = vlaneseq
  %v1034 = vshrl.u32 %v1033, 7
  %v1035 = vsub.s32 0, %v1034
  %v1036 = vrot.slane %v1031, %v1035
  %v1038 = vadd.f32 %v1030, %v1036
  %vm1039 = vcmask 7168
  %1040 = vst.msk [vmem:[%s6] sm:$0xff] %vm1039, %v1038
  // Predicated region
  $region26: #{tpu_custom_call.1} parent=0 // pred_check
    _
  $region27: #{tpu_custom_call.1} parent=0 // pred_check_branch
    %1042 = sbr.rel (0) target = $region29
  $region28: #{tpu_custom_call.1} parent=0 // pred_region
    _
  $region29: #{tpu_custom_call.1} parent=0 // pred_fallthru
    _
  // Predicated region
  $region30: #{tpu_custom_call.1} parent=0 // pred_check
    _
  $region31: #{tpu_custom_call.1} parent=0 // pred_check_branch
    %1044 = sbr.rel (0) target = $region33
  $region32: #{tpu_custom_call.1} parent=0 // pred_region
    _
  $region33: #{tpu_custom_call.1} parent=0 // pred_fallthru
    _

</llo_original>
